<compile_context>
chip_gen: v7x
topology: tpu7x:2x2x1
jax: 0.10.0
libtpu: 0.0.40
codegen_flags: <defaults>
</compile_context>

<pallas_src>
import math
import functools

import jax
import jax.numpy as jnp
from jax.experimental import pallas as pl
from jax.experimental.pallas import tpu as pltpu


# ---------------------------------------------------------------------------
# Parameter construction (mirrors creak_layer_mask / calculate_mask_index)
# ---------------------------------------------------------------------------
def calculate_mask_index(kernel_length_now, largest_kernel_length):
    right = math.ceil((largest_kernel_length - 1) / 2) - math.ceil((kernel_length_now - 1) / 2)
    left = largest_kernel_length - kernel_length_now - right
    return left, left + kernel_length_now


def build_params(layer_parameter_list, key):
    """Deterministic stand-in for creak_layer_mask (Conv1d default init, no .pt load)."""
    largest = layer_parameter_list[-1][-1]
    masks, weights, biases = [], [], []
    for (cin, cout, k) in layer_parameter_list:
        key, wk, bk = jax.random.split(key, 3)
        bound = 1.0 / math.sqrt(cin * k)          # PyTorch Conv1d default U(-b, b)
        w_small = jax.random.uniform(wk, (cout, cin, k), jnp.float32, -bound, bound)
        b = jax.random.uniform(bk, (cout,), jnp.float32, -bound, bound)
        il, ir = calculate_mask_index(k, largest)
        big_w = jnp.zeros((cout, cin, largest), jnp.float32).at[:, :, il:ir].set(w_small)
        mask = jnp.zeros((cout, cin, largest), jnp.float32).at[:, :, il:ir].set(1.0)
        masks.append(mask)
        weights.append(big_w)
        biases.append(b)
    return (jnp.concatenate(masks, axis=0),
            jnp.concatenate(weights, axis=0),
            jnp.concatenate(biases, axis=0),
            largest)


def prepare_params(weight, mask):
    """One-time prep: apply the static mask and reshape the weight for the tap-k GEMMs.

    Returns w2d: (C_out, K*C_in) with column ordering k-major, c-minor
    (column k*C_in + c == weight[:, c, k]). The conv bias is intentionally NOT
    returned: BatchNorm's mean subtraction cancels it exactly.
    """
    w = weight * mask                                        # masked once, not per call
    c_out, c_in, k = w.shape
    return jnp.transpose(w, (0, 2, 1)).reshape(c_out, k * c_in)


# ---------------------------------------------------------------------------
# Pallas kernel: conv1d as K accumulating matmuls + BatchNorm1d(train) + ReLU
# ---------------------------------------------------------------------------
def oscnn_kernel(x_ref, w_ref, out_ref, *, K, L, B, C_in, left, relu):
    # x_ref  : (C_in, B*L)     f32, lane-dense, columns interleaved as j = l*B + b
    # w_ref  : (C_out, K*C_in) f32, pre-masked, column = k*C_in + c
    # out_ref: (C_out, B*L)    f32, same column interleaving as x_ref
    n = B * L
    x = x_ref[...]
    w = w_ref[...]
    c_out = w.shape[0]

    # "Same-length" conv padding, expressed on the interleaved lane axis: a shift of s
    # sequence positions is a lane shift of s*B columns, so only the two array ends need
    # zero padding (batch boundaries are preserved by the interleaving — no masking).
    lpad = left * B
    rpad = (K - 1 - left) * B
    parts = []
    if lpad:
        parts.append(jnp.zeros((C_in, lpad), jnp.float32))
    parts.append(x)
    if rpad:
        parts.append(jnp.zeros((C_in, rpad), jnp.float32))
    xpad = jnp.concatenate(parts, axis=1) if len(parts) > 1 else x   # (C_in, B*(L+K-1))

    # Conv1d = K accumulating MXU matmuls over lane-shifted views (no im2col slab).
    acc = jnp.zeros((c_out, n), jnp.float32)
    for k in range(K):
        xk = xpad[:, k * B:k * B + n]                 # (C_in, B*L) shifted view
        wk = w[:, k * C_in:(k + 1) * C_in]            # (C_out, C_in) tap-k weights
        acc = acc + jnp.dot(wk, xk, preferred_element_type=jnp.float32)
    # Conv bias omitted on purpose: BN mean subtraction cancels per-channel constants.

    # BatchNorm1d training mode (gamma=1, beta=0): biased per-channel stats over all
    # B*L positions; two-pass centered variance to avoid E[y^2]-E[y]^2 cancellation.
    inv_n = 1.0 / n
    mean = jnp.sum(acc, axis=1, keepdims=True) * inv_n
    cent = acc - mean
    var = jnp.sum(cent * cent, axis=1, keepdims=True) * inv_n
    y = cent * jax.lax.rsqrt(var + 1e-5)

    if relu:
        y = jnp.maximum(y, 0.0)

    out_ref[...] = y.astype(out_ref.dtype)


def oscnn_forward(x, w2d, max_k, relu=True):
    """x: (B, C_in, L) f32, w2d: (C_out, K*C_in) -> (B, C_out, L)."""
    B, c_in, L = x.shape
    c_out = w2d.shape[0]
    left = (max_k - 1) // 2

    # Lane-dense activation slab with batch interleaved into lanes: column j = l*B + b.
    xflat = jnp.transpose(x, (1, 2, 0)).reshape(c_in, L * B)

    kernel = functools.partial(oscnn_kernel, K=max_k, L=L, B=B, C_in=c_in,
                               left=left, relu=relu)
    flops = 2 * c_out * c_in * max_k * B * L + 8 * c_out * B * L
    bytes_accessed = 4 * (xflat.size + w2d.size + c_out * B * L)

    y2d = pl.pallas_call(
        kernel,
        out_shape=jax.ShapeDtypeStruct((c_out, B * L), jnp.float32),
        in_specs=[pl.BlockSpec(memory_space=pltpu.MemorySpace.VMEM)] * 2,
        out_specs=pl.BlockSpec(memory_space=pltpu.MemorySpace.VMEM),
        compiler_params=pltpu.CompilerParams(vmem_limit_bytes=8 * 1024 * 1024),
        cost_estimate=pl.CostEstimate(flops=flops, transcendentals=c_out,
                                      bytes_accessed=bytes_accessed),
    )(xflat, w2d)

    # (C_out, L*B) slab with columns (l-major, b-minor) -> (B, C_out, L)
    return jnp.transpose(y2d.reshape(c_out, L, B), (2, 0, 1))


# ---------------------------------------------------------------------------
# Pure-JAX reference (mirrors the PyTorch forward, incl. the redundant bias)
# ---------------------------------------------------------------------------
def oscnn_reference(x, weight, mask, bias, max_k, relu=True):
    left = (max_k - 1) // 2
    right = max_k // 2
    xpad = jnp.pad(x, ((0, 0), (0, 0), (left, right)))
    w = weight * mask
    y = jax.lax.conv_general_dilated(
        xpad, w, window_strides=(1,), padding="VALID",
        dimension_numbers=("NCH", "OIH", "NCH"))
    y = y + bias[None, :, None]
    mean = jnp.mean(y, axis=(0, 2), keepdims=True)
    var = jnp.mean((y - mean) ** 2, axis=(0, 2), keepdims=True)
    y = (y - mean) / jnp.sqrt(var + 1e-5)
    return jnp.maximum(y, 0.0) if relu else y


if __name__ == "__main__":
    key = jax.random.PRNGKey(0)
    key, xkey = jax.random.split(key)

    # layer_parameters: list of (in_channels, out_channels, kernel_size)
    layer_parameters = [(4, 8, 3), (4, 8, 5), (4, 8, 7)]   # -> C_in=4, C_out=24, K_max=7

    mask, weight, bias, max_k = build_params(layer_parameters, key)
    x = jax.random.normal(xkey, (2, 4, 16), dtype=jnp.float32)   # (B, C_in, L)

    # One-time parameter prep (masked + GEMM-reshaped weight; bias dropped, BN cancels it).
    w2d = prepare_params(weight, mask)

    fwd = jax.jit(lambda xx, ww: oscnn_forward(xx, ww, max_k, relu=True))
    out = jax.block_until_ready(fwd(x, w2d))

    ref = oscnn_reference(x, weight, mask, bias, max_k, relu=True)
    assert out.shape == (2, 24, 16)
    assert jnp.allclose(out, ref, atol=1e-4, rtol=1e-4), "mismatch vs reference"

    print("KERNEL_OK")
</pallas_src>

<mosaic_0001>
module attributes {stable_mosaic.version = 11 : i64} {
  func.func @oscnn_kernel(%arg0: memref<4x32xf32, #tpu.memory_space<vmem>>, %arg1: memref<24x28xf32, #tpu.memory_space<vmem>>, %arg2: memref<24x32xf32, #tpu.memory_space<vmem>>) attributes {dimension_semantics = [], scalar_prefetch = 0 : i64, scratch_operands = 0 : i64, tpu.core_type = #tpu.core_type<tc>} {
    %c0 = arith.constant 0 : index
    %c0_0 = arith.constant 0 : index
    %0 = vector.load %arg0[%c0, %c0_0] : memref<4x32xf32, #tpu.memory_space<vmem>>, vector<4x32xf32>
    %c0_1 = arith.constant 0 : index
    %c0_2 = arith.constant 0 : index
    %1 = vector.load %arg1[%c0_1, %c0_2] : memref<24x28xf32, #tpu.memory_space<vmem>>, vector<24x28xf32>
    %cst = arith.constant 0.000000e+00 : f32
    %2 = vector.broadcast %cst : f32 to vector<4x6xf32>
    %cst_3 = arith.constant 0.000000e+00 : f32
    %3 = vector.broadcast %cst_3 : f32 to vector<4x6xf32>
    %4 = tpu.concatenate %2, %0, %3 in 1 : vector<4x6xf32>, vector<4x32xf32>, vector<4x6xf32> -> vector<4x44xf32>
    %cst_4 = arith.constant 0.000000e+00 : f32
    %5 = vector.broadcast %cst_4 : f32 to vector<24x32xf32>
    %6 = vector.extract_strided_slice %4 {offsets = [0, 0], sizes = [4, 32], strides = [1, 1]} : vector<4x44xf32> to vector<4x32xf32>
    %7 = vector.extract_strided_slice %1 {offsets = [0, 0], sizes = [24, 4], strides = [1, 1]} : vector<24x28xf32> to vector<24x4xf32>
    %cst_5 = arith.constant dense<0.000000e+00> : vector<24x32xf32>
    %8 = tpu.matmul %7, %6, %cst_5 {dimension_numbers = #tpu.dot_dimension_numbers<[1], [0], [0], [1], [0, 0, 1, 1], [], []>} : vector<24x4xf32>, vector<4x32xf32>, vector<24x32xf32> -> vector<24x32xf32>
    %9 = arith.addf %5, %8 : vector<24x32xf32>
    %10 = vector.extract_strided_slice %4 {offsets = [0, 2], sizes = [4, 32], strides = [1, 1]} : vector<4x44xf32> to vector<4x32xf32>
    %11 = vector.extract_strided_slice %1 {offsets = [0, 4], sizes = [24, 4], strides = [1, 1]} : vector<24x28xf32> to vector<24x4xf32>
    %cst_6 = arith.constant dense<0.000000e+00> : vector<24x32xf32>
    %12 = tpu.matmul %11, %10, %cst_6 {dimension_numbers = #tpu.dot_dimension_numbers<[1], [0], [0], [1], [0, 0, 1, 1], [], []>} : vector<24x4xf32>, vector<4x32xf32>, vector<24x32xf32> -> vector<24x32xf32>
    %13 = arith.addf %9, %12 : vector<24x32xf32>
    %14 = vector.extract_strided_slice %4 {offsets = [0, 4], sizes = [4, 32], strides = [1, 1]} : vector<4x44xf32> to vector<4x32xf32>
    %15 = vector.extract_strided_slice %1 {offsets = [0, 8], sizes = [24, 4], strides = [1, 1]} : vector<24x28xf32> to vector<24x4xf32>
    %cst_7 = arith.constant dense<0.000000e+00> : vector<24x32xf32>
    %16 = tpu.matmul %15, %14, %cst_7 {dimension_numbers = #tpu.dot_dimension_numbers<[1], [0], [0], [1], [0, 0, 1, 1], [], []>} : vector<24x4xf32>, vector<4x32xf32>, vector<24x32xf32> -> vector<24x32xf32>
    %17 = arith.addf %13, %16 : vector<24x32xf32>
    %18 = vector.extract_strided_slice %4 {offsets = [0, 6], sizes = [4, 32], strides = [1, 1]} : vector<4x44xf32> to vector<4x32xf32>
    %19 = vector.extract_strided_slice %1 {offsets = [0, 12], sizes = [24, 4], strides = [1, 1]} : vector<24x28xf32> to vector<24x4xf32>
    %cst_8 = arith.constant dense<0.000000e+00> : vector<24x32xf32>
    %20 = tpu.matmul %19, %18, %cst_8 {dimension_numbers = #tpu.dot_dimension_numbers<[1], [0], [0], [1], [0, 0, 1, 1], [], []>} : vector<24x4xf32>, vector<4x32xf32>, vector<24x32xf32> -> vector<24x32xf32>
    %21 = arith.addf %17, %20 : vector<24x32xf32>
    %22 = vector.extract_strided_slice %4 {offsets = [0, 8], sizes = [4, 32], strides = [1, 1]} : vector<4x44xf32> to vector<4x32xf32>
    %23 = vector.extract_strided_slice %1 {offsets = [0, 16], sizes = [24, 4], strides = [1, 1]} : vector<24x28xf32> to vector<24x4xf32>
    %cst_9 = arith.constant dense<0.000000e+00> : vector<24x32xf32>
    %24 = tpu.matmul %23, %22, %cst_9 {dimension_numbers = #tpu.dot_dimension_numbers<[1], [0], [0], [1], [0, 0, 1, 1], [], []>} : vector<24x4xf32>, vector<4x32xf32>, vector<24x32xf32> -> vector<24x32xf32>
    %25 = arith.addf %21, %24 : vector<24x32xf32>
    %26 = vector.extract_strided_slice %4 {offsets = [0, 10], sizes = [4, 32], strides = [1, 1]} : vector<4x44xf32> to vector<4x32xf32>
    %27 = vector.extract_strided_slice %1 {offsets = [0, 20], sizes = [24, 4], strides = [1, 1]} : vector<24x28xf32> to vector<24x4xf32>
    %cst_10 = arith.constant dense<0.000000e+00> : vector<24x32xf32>
    %28 = tpu.matmul %27, %26, %cst_10 {dimension_numbers = #tpu.dot_dimension_numbers<[1], [0], [0], [1], [0, 0, 1, 1], [], []>} : vector<24x4xf32>, vector<4x32xf32>, vector<24x32xf32> -> vector<24x32xf32>
    %29 = arith.addf %25, %28 : vector<24x32xf32>
    %30 = vector.extract_strided_slice %4 {offsets = [0, 12], sizes = [4, 32], strides = [1, 1]} : vector<4x44xf32> to vector<4x32xf32>
    %31 = vector.extract_strided_slice %1 {offsets = [0, 24], sizes = [24, 4], strides = [1, 1]} : vector<24x28xf32> to vector<24x4xf32>
    %cst_11 = arith.constant dense<0.000000e+00> : vector<24x32xf32>
    %32 = tpu.matmul %31, %30, %cst_11 {dimension_numbers = #tpu.dot_dimension_numbers<[1], [0], [0], [1], [0, 0, 1, 1], [], []>} : vector<24x4xf32>, vector<4x32xf32>, vector<24x32xf32> -> vector<24x32xf32>
    %33 = arith.addf %29, %32 : vector<24x32xf32>
    %cst_12 = arith.constant dense<0.000000e+00> : vector<24xf32>
    %34 = vector.multi_reduction <add>, %33, %cst_12 [1] : vector<24x32xf32> to vector<24xf32>
    %35 = vector.shape_cast %34 : vector<24xf32> to vector<24x1xf32>
    %cst_13 = arith.constant 3.125000e-02 : f32
    %36 = vector.broadcast %cst_13 : f32 to vector<24x1xf32>
    %37 = arith.mulf %35, %36 : vector<24x1xf32>
    %38 = vector.broadcast %37 : vector<24x1xf32> to vector<24x32xf32>
    %39 = arith.subf %33, %38 : vector<24x32xf32>
    %40 = arith.mulf %39, %39 : vector<24x32xf32>
    %cst_14 = arith.constant dense<0.000000e+00> : vector<24xf32>
    %41 = vector.multi_reduction <add>, %40, %cst_14 [1] : vector<24x32xf32> to vector<24xf32>
    %42 = vector.shape_cast %41 : vector<24xf32> to vector<24x1xf32>
    %cst_15 = arith.constant 3.125000e-02 : f32
    %43 = vector.broadcast %cst_15 : f32 to vector<24x1xf32>
    %44 = arith.mulf %42, %43 : vector<24x1xf32>
    %cst_16 = arith.constant 9.99999974E-6 : f32
    %45 = vector.broadcast %cst_16 : f32 to vector<24x1xf32>
    %46 = arith.addf %44, %45 : vector<24x1xf32>
    %47 = math.rsqrt %46 : vector<24x1xf32>
    %48 = vector.broadcast %47 : vector<24x1xf32> to vector<24x32xf32>
    %49 = arith.mulf %39, %48 : vector<24x32xf32>
    %cst_17 = arith.constant 0.000000e+00 : f32
    %50 = vector.broadcast %cst_17 : f32 to vector<24x32xf32>
    %51 = arith.maximumf %49, %50 : vector<24x32xf32>
    %c0_18 = arith.constant 0 : index
    %c0_19 = arith.constant 0 : index
    %52 = vector.load %arg2[%c0_18, %c0_19] : memref<24x32xf32, #tpu.memory_space<vmem>>, vector<24x32xf32>
    tpu.vector_store %arg2[%c0_18, %c0_19], %51 {strides = array<i32>} : memref<24x32xf32, #tpu.memory_space<vmem>>, vector<24x32xf32>,
    return
  }
}

</mosaic_0001>

<llo_original>
// kernel: _lambda_.1
$region0: #{_lambda_.1}
  #allocation0 [shape = 'u32[]', space=smem, size = 0x4, offset = 0x4, fixed_abs, tag = 'smem constant byte address 0x4 - core index']
  #allocation1 [shape = 'u32[144,128]{1,0:T(1,128)}', space=vmem, size = 0x12000, scoped, tag = 'internal scratch']
  %s0 = inlined_call_operand.vmem [shape: f32[4,32], index: 0, kind: input, shape index: {}]
  %s1 = inlined_call_operand.vmem [shape: f32[24,28], index: 1, kind: input, shape index: {}]
  %s2 = inlined_call_operand.vmem [shape: f32[24,32], index: 2, kind: output, shape index: {}]
  %s3 = sld [smem:[#allocation0]]
  $region18: #{_lambda_.1} parent=0
    _
  %s5 = ssub.s32 1, %s3
  %s6 = scalar_select 0, %s5, %s3
  // Predicated region
  $region2: #{_lambda_.1} parent=0 // pred_check
    _
  $region3: #{_lambda_.1} parent=0 // pred_check_branch
    %8 = sbr.rel (0) target = $region5
  $region4: #{_lambda_.1} parent=0 // pred_region
    _
  $region5: #{_lambda_.1} parent=0 // pred_fallthru
    _
  // Predicated region
  $region6: #{_lambda_.1} parent=0 // pred_check
    _
  $region7: #{_lambda_.1} parent=0 // pred_check_branch
    %10 = sbr.rel (0) target = $region9
  $region8: #{_lambda_.1} parent=0 // pred_region
    _
  $region9: #{_lambda_.1} parent=0 // pred_fallthru
    _
  %v11 = vld [vmem:[%s0] sm:$0xf]
  %v12 = vld [vmem:[%s1] sm:$0xff]
  %v13 = vld [vmem:[%s1 + $0x8] sm:$0xff]
  %v14 = vld [vmem:[%s1 + $0x10] sm:$0xff]
  %16 = vrot.lane.b32.xlu0 %v11, 6
  %v17 = vpop.permute.xlu0 %16
  %vm19 = vcmask 48128
  %v20 = vsel %vm19, 0.0, %v17
  %vm21 = vcmask 310272
  %v22 = vsel %vm21, %v20, 0.0
  %26 = vrot.lane.b32.xlu0 %v12, 124
  %v27 = vpop.permute.xlu0 %26
  %28 = vrot.lane.b32.xlu0 %v13, 124
  %v29 = vpop.permute.xlu0 %28
  %30 = vrot.lane.b32.xlu0 %v14, 124
  %v31 = vpop.permute.xlu0 %30
  %33 = vrot.lane.b32.xlu0 %v22, 126
  %v34 = vpop.permute.xlu0 %33
  %vm35 = vcmask 31744
  %v36 = vsel %vm35, %v27, 0
  %v38 = vsel %vm35, %v29, 0
  %v40 = vsel %vm35, %v31, 0
  %vm42 = vcmask 1043456
  %v43 = vsel %vm42, %v34, 0
  %45 = vmatprep.subr.mxu0 0.0
  %46 = vmatpush1.msra.mxu0 %v43
  %47 = vmatprep.subr.mxu0 0.0
  %48 = vmatpush1.msra.mxu0 0.0
  %49 = vmatprep.subr.mxu0 0.0
  %50 = vmatpush1.msra.mxu0 0.0
  %51 = vmatprep.subr.mxu0 0.0
  %52 = vmatpush1.msra.mxu0 0.0
  %53 = vmatprep.subr.mxu0 0.0
  %54 = vmatpush1.msra.mxu0 0.0
  %55 = vmatprep.subr.mxu0 0.0
  %56 = vmatpush1.msra.mxu0 0.0
  %57 = vmatprep.subr.mxu0 0.0
  %58 = vmatpush1.msra.mxu0 0.0
  %59 = vmatprep.subr.mxu0 0.0
  %60 = vmatpush1.msra.mxu0 0.0
  %61 = vmatprep.subr.mxu0 0.0
  %62 = vmatpush1.msra.mxu0 0.0
  %63 = vmatprep.subr.mxu0 0.0
  %64 = vmatpush1.msra.mxu0 0.0
  %65 = vmatprep.subr.mxu0 0.0
  %66 = vmatpush1.msra.mxu0 0.0
  %67 = vmatprep.subr.mxu0 0.0
  %68 = vmatpush1.msra.mxu0 0.0
  %69 = vmatprep.subr.mxu0 0.0
  %70 = vmatpush1.msra.mxu0 0.0
  %71 = vmatprep.subr.mxu0 0.0
  %72 = vmatpush1.msra.mxu0 0.0
  %73 = vmatprep.subr.mxu0 0.0
  %74 = vmatpush1.msra.mxu0 0.0
  %75 = vmatprep.subr.mxu0 0.0
  %76 = vmatpush1.msra.mxu0 0.0
  %77 = vmatprep.subr.mxu0 0.0
  %78 = vmatpush1.msra.mxu0 0.0
  %79 = vmatprep.subr.mxu0 0.0
  %80 = vmatpush1.msra.mxu0 0.0
  %81 = vmatprep.subr.mxu0 0.0
  %82 = vmatpush1.msra.mxu0 0.0
  %83 = vmatprep.subr.mxu0 0.0
  %84 = vmatpush1.msra.mxu0 0.0
  %85 = vmatprep.subr.mxu0 0.0
  %86 = vmatpush1.msra.mxu0 0.0
  %87 = vmatprep.subr.mxu0 0.0
  %88 = vmatpush1.msra.mxu0 0.0
  %89 = vmatprep.subr.mxu0 0.0
  %90 = vmatpush1.msra.mxu0 0.0
  %91 = vmatprep.subr.mxu0 0.0
  %92 = vmatpush1.msra.mxu0 0.0
  %93 = vmatprep.subr.mxu0 0.0
  %94 = vmatpush1.msra.mxu0 0.0
  %95 = vmatprep.subr.mxu0 0.0
  %96 = vmatpush1.msra.mxu0 0.0
  %97 = vmatprep.subr.mxu0 0.0
  %98 = vmatpush1.msra.mxu0 0.0
  %99 = vmatprep.subr.mxu0 0.0
  %100 = vmatpush1.msra.mxu0 0.0
  %101 = vmatprep.subr.mxu0 0.0
  %102 = vmatpush1.msra.mxu0 0.0
  %103 = vmatprep.subr.mxu0 0.0
  %104 = vmatpush1.msra.mxu0 0.0
  %105 = vmatprep.subr.mxu0 0.0
  %106 = vmatpush1.msra.mxu0 0.0
  %107 = vmatprep.subr.mxu0 0.0
  %108 = vmatpush1.msra.mxu0 0.0
  %109 = vmatprep.mubr.f32.mxu0 0.0
  %110 = vmatmul.mubr.f32.gmra.mrb[0].mxu0 %v36
  %v111 = vpop.f32.mrb[0].mxu0
  %v112 = vadd.f32 0.0, %v111
  %v113 = vpop.f32.mrb[0].mxu0
  %114 = vmatprep.mubr.f32.mxu0 0.0
  %115 = vmatmul.mubr.f32.gmra.mrb[0].mxu0 %v38
  %v116 = vpop.f32.mrb[0].mxu0
  %v117 = vadd.f32 0.0, %v116
  %v118 = vpop.f32.mrb[0].mxu0
  %119 = vmatprep.mubr.f32.mxu0 0.0
  %120 = vmatmul.mubr.f32.gmra.mrb[0].mxu0 %v40
  %v121 = vpop.f32.mrb[0].mxu0
  %v122 = vadd.f32 0.0, %v121
  %v123 = vpop.f32.mrb[0].mxu0
  %124 = vdwg.mxu0
  %v125 = vsel %vm35, %v12, 0
  %v127 = vsel %vm35, %v13, 0
  %v129 = vsel %vm35, %v14, 0
  %v131 = vsel %vm42, %v22, 0
  %133 = vmatprep.subr.mxu0 0.0
  %134 = vmatpush1.msra.mxu0 %v131
  %135 = vmatprep.subr.mxu0 0.0
  %136 = vmatpush1.msra.mxu0 0.0
  %137 = vmatprep.subr.mxu0 0.0
  %138 = vmatpush1.msra.mxu0 0.0
  %139 = vmatprep.subr.mxu0 0.0
  %140 = vmatpush1.msra.mxu0 0.0
  %141 = vmatprep.subr.mxu0 0.0
  %142 = vmatpush1.msra.mxu0 0.0
  %143 = vmatprep.subr.mxu0 0.0
  %144 = vmatpush1.msra.mxu0 0.0
  %145 = vmatprep.subr.mxu0 0.0
  %146 = vmatpush1.msra.mxu0 0.0
  %147 = vmatprep.subr.mxu0 0.0
  %148 = vmatpush1.msra.mxu0 0.0
  %149 = vmatprep.subr.mxu0 0.0
  %150 = vmatpush1.msra.mxu0 0.0
  %151 = vmatprep.subr.mxu0 0.0
  %152 = vmatpush1.msra.mxu0 0.0
  %153 = vmatprep.subr.mxu0 0.0
  %154 = vmatpush1.msra.mxu0 0.0
  %155 = vmatprep.subr.mxu0 0.0
  %156 = vmatpush1.msra.mxu0 0.0
  %157 = vmatprep.subr.mxu0 0.0
  %158 = vmatpush1.msra.mxu0 0.0
  %159 = vmatprep.subr.mxu0 0.0
  %160 = vmatpush1.msra.mxu0 0.0
  %161 = vmatprep.subr.mxu0 0.0
  %162 = vmatpush1.msra.mxu0 0.0
  %163 = vmatprep.subr.mxu0 0.0
  %164 = vmatpush1.msra.mxu0 0.0
  %165 = vmatprep.subr.mxu0 0.0
  %166 = vmatpush1.msra.mxu0 0.0
  %167 = vmatprep.subr.mxu0 0.0
  %168 = vmatpush1.msra.mxu0 0.0
  %169 = vmatprep.subr.mxu0 0.0
  %170 = vmatpush1.msra.mxu0 0.0
  %171 = vmatprep.subr.mxu0 0.0
  %172 = vmatpush1.msra.mxu0 0.0
  %173 = vmatprep.subr.mxu0 0.0
  %174 = vmatpush1.msra.mxu0 0.0
  %175 = vmatprep.subr.mxu0 0.0
  %176 = vmatpush1.msra.mxu0 0.0
  %177 = vmatprep.subr.mxu0 0.0
  %178 = vmatpush1.msra.mxu0 0.0
  %179 = vmatprep.subr.mxu0 0.0
  %180 = vmatpush1.msra.mxu0 0.0
  %181 = vmatprep.subr.mxu0 0.0
  %182 = vmatpush1.msra.mxu0 0.0
  %183 = vmatprep.subr.mxu0 0.0
  %184 = vmatpush1.msra.mxu0 0.0
  %185 = vmatprep.subr.mxu0 0.0
  %186 = vmatpush1.msra.mxu0 0.0
  %187 = vmatprep.subr.mxu0 0.0
  %188 = vmatpush1.msra.mxu0 0.0
  %189 = vmatprep.subr.mxu0 0.0
  %190 = vmatpush1.msra.mxu0 0.0
  %191 = vmatprep.subr.mxu0 0.0
  %192 = vmatpush1.msra.mxu0 0.0
  %193 = vmatprep.subr.mxu0 0.0
  %194 = vmatpush1.msra.mxu0 0.0
  %195 = vmatprep.subr.mxu0 0.0
  %196 = vmatpush1.msra.mxu0 0.0
  %197 = vmatprep.mubr.f32.mxu0 0.0
  %198 = vmatmul.mubr.f32.gmra.mrb[0].mxu0 %v125
  %v199 = vpop.f32.mrb[0].mxu0
  %v200 = vadd.f32 %v112, %v199
  %v201 = vpop.f32.mrb[0].mxu0
  %202 = vmatprep.mubr.f32.mxu0 0.0
  %203 = vmatmul.mubr.f32.gmra.mrb[0].mxu0 %v127
  %v204 = vpop.f32.mrb[0].mxu0
  %v205 = vadd.f32 %v117, %v204
  %v206 = vpop.f32.mrb[0].mxu0
  %207 = vmatprep.mubr.f32.mxu0 0.0
  %208 = vmatmul.mubr.f32.gmra.mrb[0].mxu0 %v129
  %v209 = vpop.f32.mrb[0].mxu0
  %v210 = vadd.f32 %v122, %v209
  %v211 = vpop.f32.mrb[0].mxu0
  %212 = vdwg.mxu0
  %213 = vrot.lane.b32.xlu0 %v12, 120
  %v214 = vpop.permute.xlu0 %213
  %215 = vrot.lane.b32.xlu0 %v13, 120
  %v216 = vpop.permute.xlu0 %215
  %217 = vrot.lane.b32.xlu0 %v14, 120
  %v218 = vpop.permute.xlu0 %217
  %219 = vrot.lane.b32.xlu0 %v22, 124
  %v220 = vpop.permute.xlu0 %219
  %v221 = vsel %vm35, %v214, 0
  %v223 = vsel %vm35, %v216, 0
  %v225 = vsel %vm35, %v218, 0
  %v227 = vsel %vm42, %v220, 0
  %229 = vmatprep.subr.mxu0 0.0
  %230 = vmatpush1.msra.mxu0 %v227
  %231 = vmatprep.subr.mxu0 0.0
  %232 = vmatpush1.msra.mxu0 0.0
  %233 = vmatprep.subr.mxu0 0.0
  %234 = vmatpush1.msra.mxu0 0.0
  %235 = vmatprep.subr.mxu0 0.0
  %236 = vmatpush1.msra.mxu0 0.0
  %237 = vmatprep.subr.mxu0 0.0
  %238 = vmatpush1.msra.mxu0 0.0
  %239 = vmatprep.subr.mxu0 0.0
  %240 = vmatpush1.msra.mxu0 0.0
  %241 = vmatprep.subr.mxu0 0.0
  %242 = vmatpush1.msra.mxu0 0.0
  %243 = vmatprep.subr.mxu0 0.0
  %244 = vmatpush1.msra.mxu0 0.0
  %245 = vmatprep.subr.mxu0 0.0
  %246 = vmatpush1.msra.mxu0 0.0
  %247 = vmatprep.subr.mxu0 0.0
  %248 = vmatpush1.msra.mxu0 0.0
  %249 = vmatprep.subr.mxu0 0.0
  %250 = vmatpush1.msra.mxu0 0.0
  %251 = vmatprep.subr.mxu0 0.0
  %252 = vmatpush1.msra.mxu0 0.0
  %253 = vmatprep.subr.mxu0 0.0
  %254 = vmatpush1.msra.mxu0 0.0
  %255 = vmatprep.subr.mxu0 0.0
  %256 = vmatpush1.msra.mxu0 0.0
  %257 = vmatprep.subr.mxu0 0.0
  %258 = vmatpush1.msra.mxu0 0.0
  %259 = vmatprep.subr.mxu0 0.0
  %260 = vmatpush1.msra.mxu0 0.0
  %261 = vmatprep.subr.mxu0 0.0
  %262 = vmatpush1.msra.mxu0 0.0
  %263 = vmatprep.subr.mxu0 0.0
  %264 = vmatpush1.msra.mxu0 0.0
  %265 = vmatprep.subr.mxu0 0.0
  %266 = vmatpush1.msra.mxu0 0.0
  %267 = vmatprep.subr.mxu0 0.0
  %268 = vmatpush1.msra.mxu0 0.0
  %269 = vmatprep.subr.mxu0 0.0
  %270 = vmatpush1.msra.mxu0 0.0
  %271 = vmatprep.subr.mxu0 0.0
  %272 = vmatpush1.msra.mxu0 0.0
  %273 = vmatprep.subr.mxu0 0.0
  %274 = vmatpush1.msra.mxu0 0.0
  %275 = vmatprep.subr.mxu0 0.0
  %276 = vmatpush1.msra.mxu0 0.0
  %277 = vmatprep.subr.mxu0 0.0
  %278 = vmatpush1.msra.mxu0 0.0
  %279 = vmatprep.subr.mxu0 0.0
  %280 = vmatpush1.msra.mxu0 0.0
  %281 = vmatprep.subr.mxu0 0.0
  %282 = vmatpush1.msra.mxu0 0.0
  %283 = vmatprep.subr.mxu0 0.0
  %284 = vmatpush1.msra.mxu0 0.0
  %285 = vmatprep.subr.mxu0 0.0
  %286 = vmatpush1.msra.mxu0 0.0
  %287 = vmatprep.subr.mxu0 0.0
  %288 = vmatpush1.msra.mxu0 0.0
  %289 = vmatprep.subr.mxu0 0.0
  %290 = vmatpush1.msra.mxu0 0.0
  %291 = vmatprep.subr.mxu0 0.0
  %292 = vmatpush1.msra.mxu0 0.0
  %293 = vmatprep.mubr.f32.mxu0 0.0
  %294 = vmatmul.mubr.f32.gmra.mrb[0].mxu0 %v221
  %v295 = vpop.f32.mrb[0].mxu0
  %v296 = vadd.f32 0.0, %v295
  %v297 = vpop.f32.mrb[0].mxu0
  %298 = vmatprep.mubr.f32.mxu0 0.0
  %299 = vmatmul.mubr.f32.gmra.mrb[0].mxu0 %v223
  %v300 = vpop.f32.mrb[0].mxu0
  %v301 = vadd.f32 0.0, %v300
  %v302 = vpop.f32.mrb[0].mxu0
  %303 = vmatprep.mubr.f32.mxu0 0.0
  %304 = vmatmul.mubr.f32.gmra.mrb[0].mxu0 %v225
  %v305 = vpop.f32.mrb[0].mxu0
  %v306 = vadd.f32 0.0, %v305
  %v307 = vpop.f32.mrb[0].mxu0
  %308 = vdwg.mxu0
  %v309 = vadd.f32 %v200, %v296
  %v310 = vadd.f32 %v205, %v301
  %v311 = vadd.f32 %v210, %v306
  %312 = vrot.lane.b32.xlu0 %v12, 116
  %v313 = vpop.permute.xlu0 %312
  %314 = vrot.lane.b32.xlu0 %v13, 116
  %v315 = vpop.permute.xlu0 %314
  %316 = vrot.lane.b32.xlu0 %v14, 116
  %v317 = vpop.permute.xlu0 %316
  %318 = vrot.lane.b32.xlu0 %v22, 122
  %v319 = vpop.permute.xlu0 %318
  %v320 = vsel %vm35, %v313, 0
  %v322 = vsel %vm35, %v315, 0
  %v324 = vsel %vm35, %v317, 0
  %v326 = vsel %vm42, %v319, 0
  %328 = vmatprep.subr.mxu0 0.0
  %329 = vmatpush1.msra.mxu0 %v326
  %330 = vmatprep.subr.mxu0 0.0
  %331 = vmatpush1.msra.mxu0 0.0
  %332 = vmatprep.subr.mxu0 0.0
  %333 = vmatpush1.msra.mxu0 0.0
  %334 = vmatprep.subr.mxu0 0.0
  %335 = vmatpush1.msra.mxu0 0.0
  %336 = vmatprep.subr.mxu0 0.0
  %337 = vmatpush1.msra.mxu0 0.0
  %338 = vmatprep.subr.mxu0 0.0
  %339 = vmatpush1.msra.mxu0 0.0
  %340 = vmatprep.subr.mxu0 0.0
  %341 = vmatpush1.msra.mxu0 0.0
  %342 = vmatprep.subr.mxu0 0.0
  %343 = vmatpush1.msra.mxu0 0.0
  %344 = vmatprep.subr.mxu0 0.0
  %345 = vmatpush1.msra.mxu0 0.0
  %346 = vmatprep.subr.mxu0 0.0
  %347 = vmatpush1.msra.mxu0 0.0
  %348 = vmatprep.subr.mxu0 0.0
  %349 = vmatpush1.msra.mxu0 0.0
  %350 = vmatprep.subr.mxu0 0.0
  %351 = vmatpush1.msra.mxu0 0.0
  %352 = vmatprep.subr.mxu0 0.0
  %353 = vmatpush1.msra.mxu0 0.0
  %354 = vmatprep.subr.mxu0 0.0
  %355 = vmatpush1.msra.mxu0 0.0
  %356 = vmatprep.subr.mxu0 0.0
  %357 = vmatpush1.msra.mxu0 0.0
  %358 = vmatprep.subr.mxu0 0.0
  %359 = vmatpush1.msra.mxu0 0.0
  %360 = vmatprep.subr.mxu0 0.0
  %361 = vmatpush1.msra.mxu0 0.0
  %362 = vmatprep.subr.mxu0 0.0
  %363 = vmatpush1.msra.mxu0 0.0
  %364 = vmatprep.subr.mxu0 0.0
  %365 = vmatpush1.msra.mxu0 0.0
  %366 = vmatprep.subr.mxu0 0.0
  %367 = vmatpush1.msra.mxu0 0.0
  %368 = vmatprep.subr.mxu0 0.0
  %369 = vmatpush1.msra.mxu0 0.0
  %370 = vmatprep.subr.mxu0 0.0
  %371 = vmatpush1.msra.mxu0 0.0
  %372 = vmatprep.subr.mxu0 0.0
  %373 = vmatpush1.msra.mxu0 0.0
  %374 = vmatprep.subr.mxu0 0.0
  %375 = vmatpush1.msra.mxu0 0.0
  %376 = vmatprep.subr.mxu0 0.0
  %377 = vmatpush1.msra.mxu0 0.0
  %378 = vmatprep.subr.mxu0 0.0
  %379 = vmatpush1.msra.mxu0 0.0
  %380 = vmatprep.subr.mxu0 0.0
  %381 = vmatpush1.msra.mxu0 0.0
  %382 = vmatprep.subr.mxu0 0.0
  %383 = vmatpush1.msra.mxu0 0.0
  %384 = vmatprep.subr.mxu0 0.0
  %385 = vmatpush1.msra.mxu0 0.0
  %386 = vmatprep.subr.mxu0 0.0
  %387 = vmatpush1.msra.mxu0 0.0
  %388 = vmatprep.subr.mxu0 0.0
  %389 = vmatpush1.msra.mxu0 0.0
  %390 = vmatprep.subr.mxu0 0.0
  %391 = vmatpush1.msra.mxu0 0.0
  %392 = vmatprep.mubr.f32.mxu0 0.0
  %393 = vmatmul.mubr.f32.gmra.mrb[0].mxu0 %v320
  %v394 = vpop.f32.mrb[0].mxu0
  %v395 = vadd.f32 0.0, %v394
  %v396 = vpop.f32.mrb[0].mxu0
  %397 = vmatprep.mubr.f32.mxu0 0.0
  %398 = vmatmul.mubr.f32.gmra.mrb[0].mxu0 %v322
  %v399 = vpop.f32.mrb[0].mxu0
  %v400 = vadd.f32 0.0, %v399
  %v401 = vpop.f32.mrb[0].mxu0
  %402 = vmatprep.mubr.f32.mxu0 0.0
  %403 = vmatmul.mubr.f32.gmra.mrb[0].mxu0 %v324
  %v404 = vpop.f32.mrb[0].mxu0
  %v405 = vadd.f32 0.0, %v404
  %v406 = vpop.f32.mrb[0].mxu0
  %407 = vdwg.mxu0
  %v408 = vadd.f32 %v309, %v395
  %v409 = vadd.f32 %v310, %v400
  %v410 = vadd.f32 %v311, %v405
  %411 = vrot.lane.b32.xlu0 %v12, 112
  %v412 = vpop.permute.xlu0 %411
  %413 = vrot.lane.b32.xlu0 %v13, 112
  %v414 = vpop.permute.xlu0 %413
  %415 = vrot.lane.b32.xlu0 %v14, 112
  %v416 = vpop.permute.xlu0 %415
  %417 = vrot.lane.b32.xlu0 %v22, 120
  %v418 = vpop.permute.xlu0 %417
  %v419 = vsel %vm35, %v412, 0
  %v421 = vsel %vm35, %v414, 0
  %v423 = vsel %vm35, %v416, 0
  %v425 = vsel %vm42, %v418, 0
  %427 = vmatprep.subr.mxu0 0.0
  %428 = vmatpush1.msra.mxu0 %v425
  %429 = vmatprep.subr.mxu0 0.0
  %430 = vmatpush1.msra.mxu0 0.0
  %431 = vmatprep.subr.mxu0 0.0
  %432 = vmatpush1.msra.mxu0 0.0
  %433 = vmatprep.subr.mxu0 0.0
  %434 = vmatpush1.msra.mxu0 0.0
  %435 = vmatprep.subr.mxu0 0.0
  %436 = vmatpush1.msra.mxu0 0.0
  %437 = vmatprep.subr.mxu0 0.0
  %438 = vmatpush1.msra.mxu0 0.0
  %439 = vmatprep.subr.mxu0 0.0
  %440 = vmatpush1.msra.mxu0 0.0
  %441 = vmatprep.subr.mxu0 0.0
  %442 = vmatpush1.msra.mxu0 0.0
  %443 = vmatprep.subr.mxu0 0.0
  %444 = vmatpush1.msra.mxu0 0.0
  %445 = vmatprep.subr.mxu0 0.0
  %446 = vmatpush1.msra.mxu0 0.0
  %447 = vmatprep.subr.mxu0 0.0
  %448 = vmatpush1.msra.mxu0 0.0
  %449 = vmatprep.subr.mxu0 0.0
  %450 = vmatpush1.msra.mxu0 0.0
  %451 = vmatprep.subr.mxu0 0.0
  %452 = vmatpush1.msra.mxu0 0.0
  %453 = vmatprep.subr.mxu0 0.0
  %454 = vmatpush1.msra.mxu0 0.0
  %455 = vmatprep.subr.mxu0 0.0
  %456 = vmatpush1.msra.mxu0 0.0
  %457 = vmatprep.subr.mxu0 0.0
  %458 = vmatpush1.msra.mxu0 0.0
  %459 = vmatprep.subr.mxu0 0.0
  %460 = vmatpush1.msra.mxu0 0.0
  %461 = vmatprep.subr.mxu0 0.0
  %462 = vmatpush1.msra.mxu0 0.0
  %463 = vmatprep.subr.mxu0 0.0
  %464 = vmatpush1.msra.mxu0 0.0
  %465 = vmatprep.subr.mxu0 0.0
  %466 = vmatpush1.msra.mxu0 0.0
  %467 = vmatprep.subr.mxu0 0.0
  %468 = vmatpush1.msra.mxu0 0.0
  %469 = vmatprep.subr.mxu0 0.0
  %470 = vmatpush1.msra.mxu0 0.0
  %471 = vmatprep.subr.mxu0 0.0
  %472 = vmatpush1.msra.mxu0 0.0
  %473 = vmatprep.subr.mxu0 0.0
  %474 = vmatpush1.msra.mxu0 0.0
  %475 = vmatprep.subr.mxu0 0.0
  %476 = vmatpush1.msra.mxu0 0.0
  %477 = vmatprep.subr.mxu0 0.0
  %478 = vmatpush1.msra.mxu0 0.0
  %479 = vmatprep.subr.mxu0 0.0
  %480 = vmatpush1.msra.mxu0 0.0
  %481 = vmatprep.subr.mxu0 0.0
  %482 = vmatpush1.msra.mxu0 0.0
  %483 = vmatprep.subr.mxu0 0.0
  %484 = vmatpush1.msra.mxu0 0.0
  %485 = vmatprep.subr.mxu0 0.0
  %486 = vmatpush1.msra.mxu0 0.0
  %487 = vmatprep.subr.mxu0 0.0
  %488 = vmatpush1.msra.mxu0 0.0
  %489 = vmatprep.subr.mxu0 0.0
  %490 = vmatpush1.msra.mxu0 0.0
  %491 = vmatprep.mubr.f32.mxu0 0.0
  %492 = vmatmul.mubr.f32.gmra.mrb[0].mxu0 %v419
  %v493 = vpop.f32.mrb[0].mxu0
  %v494 = vadd.f32 0.0, %v493
  %v495 = vpop.f32.mrb[0].mxu0
  %496 = vmatprep.mubr.f32.mxu0 0.0
  %497 = vmatmul.mubr.f32.gmra.mrb[0].mxu0 %v421
  %v498 = vpop.f32.mrb[0].mxu0
  %v499 = vadd.f32 0.0, %v498
  %v500 = vpop.f32.mrb[0].mxu0
  %501 = vmatprep.mubr.f32.mxu0 0.0
  %502 = vmatmul.mubr.f32.gmra.mrb[0].mxu0 %v423
  %v503 = vpop.f32.mrb[0].mxu0
  %v504 = vadd.f32 0.0, %v503
  %v505 = vpop.f32.mrb[0].mxu0
  %506 = vdwg.mxu0
  %v507 = vadd.f32 %v408, %v494
  %v508 = vadd.f32 %v409, %v499
  %v509 = vadd.f32 %v410, %v504
  %510 = vrot.lane.b32.xlu0 %v12, 108
  %v511 = vpop.permute.xlu0 %510
  %512 = vrot.lane.b32.xlu0 %v13, 108
  %v513 = vpop.permute.xlu0 %512
  %514 = vrot.lane.b32.xlu0 %v14, 108
  %v515 = vpop.permute.xlu0 %514
  %516 = vrot.lane.b32.xlu0 %v22, 118
  %v517 = vpop.permute.xlu0 %516
  %v518 = vsel %vm35, %v511, 0
  %v520 = vsel %vm35, %v513, 0
  %v522 = vsel %vm35, %v515, 0
  %v524 = vsel %vm42, %v517, 0
  %526 = vmatprep.subr.mxu0 0.0
  %527 = vmatpush1.msra.mxu0 %v524
  %528 = vmatprep.subr.mxu0 0.0
  %529 = vmatpush1.msra.mxu0 0.0
  %530 = vmatprep.subr.mxu0 0.0
  %531 = vmatpush1.msra.mxu0 0.0
  %532 = vmatprep.subr.mxu0 0.0
  %533 = vmatpush1.msra.mxu0 0.0
  %534 = vmatprep.subr.mxu0 0.0
  %535 = vmatpush1.msra.mxu0 0.0
  %536 = vmatprep.subr.mxu0 0.0
  %537 = vmatpush1.msra.mxu0 0.0
  %538 = vmatprep.subr.mxu0 0.0
  %539 = vmatpush1.msra.mxu0 0.0
  %540 = vmatprep.subr.mxu0 0.0
  %541 = vmatpush1.msra.mxu0 0.0
  %542 = vmatprep.subr.mxu0 0.0
  %543 = vmatpush1.msra.mxu0 0.0
  %544 = vmatprep.subr.mxu0 0.0
  %545 = vmatpush1.msra.mxu0 0.0
  %546 = vmatprep.subr.mxu0 0.0
  %547 = vmatpush1.msra.mxu0 0.0
  %548 = vmatprep.subr.mxu0 0.0
  %549 = vmatpush1.msra.mxu0 0.0
  %550 = vmatprep.subr.mxu0 0.0
  %551 = vmatpush1.msra.mxu0 0.0
  %552 = vmatprep.subr.mxu0 0.0
  %553 = vmatpush1.msra.mxu0 0.0
  %554 = vmatprep.subr.mxu0 0.0
  %555 = vmatpush1.msra.mxu0 0.0
  %556 = vmatprep.subr.mxu0 0.0
  %557 = vmatpush1.msra.mxu0 0.0
  %558 = vmatprep.subr.mxu0 0.0
  %559 = vmatpush1.msra.mxu0 0.0
  %560 = vmatprep.subr.mxu0 0.0
  %561 = vmatpush1.msra.mxu0 0.0
  %562 = vmatprep.subr.mxu0 0.0
  %563 = vmatpush1.msra.mxu0 0.0
  %564 = vmatprep.subr.mxu0 0.0
  %565 = vmatpush1.msra.mxu0 0.0
  %566 = vmatprep.subr.mxu0 0.0
  %567 = vmatpush1.msra.mxu0 0.0
  %568 = vmatprep.subr.mxu0 0.0
  %569 = vmatpush1.msra.mxu0 0.0
  %570 = vmatprep.subr.mxu0 0.0
  %571 = vmatpush1.msra.mxu0 0.0
  %572 = vmatprep.subr.mxu0 0.0
  %573 = vmatpush1.msra.mxu0 0.0
  %574 = vmatprep.subr.mxu0 0.0
  %575 = vmatpush1.msra.mxu0 0.0
  %576 = vmatprep.subr.mxu0 0.0
  %577 = vmatpush1.msra.mxu0 0.0
  %578 = vmatprep.subr.mxu0 0.0
  %579 = vmatpush1.msra.mxu0 0.0
  %580 = vmatprep.subr.mxu0 0.0
  %581 = vmatpush1.msra.mxu0 0.0
  %582 = vmatprep.subr.mxu0 0.0
  %583 = vmatpush1.msra.mxu0 0.0
  %584 = vmatprep.subr.mxu0 0.0
  %585 = vmatpush1.msra.mxu0 0.0
  %586 = vmatprep.subr.mxu0 0.0
  %587 = vmatpush1.msra.mxu0 0.0
  %588 = vmatprep.subr.mxu0 0.0
  %589 = vmatpush1.msra.mxu0 0.0
  %590 = vmatprep.mubr.f32.mxu0 0.0
  %591 = vmatmul.mubr.f32.gmra.mrb[0].mxu0 %v518
  %v592 = vpop.f32.mrb[0].mxu0
  %v593 = vadd.f32 0.0, %v592
  %v594 = vpop.f32.mrb[0].mxu0
  %595 = vmatprep.mubr.f32.mxu0 0.0
  %596 = vmatmul.mubr.f32.gmra.mrb[0].mxu0 %v520
  %v597 = vpop.f32.mrb[0].mxu0
  %v598 = vadd.f32 0.0, %v597
  %v599 = vpop.f32.mrb[0].mxu0
  %600 = vmatprep.mubr.f32.mxu0 0.0
  %601 = vmatmul.mubr.f32.gmra.mrb[0].mxu0 %v522
  %v602 = vpop.f32.mrb[0].mxu0
  %v603 = vadd.f32 0.0, %v602
  %v604 = vpop.f32.mrb[0].mxu0
  %605 = vdwg.mxu0
  %v606 = vadd.f32 %v507, %v593
  %v607 = vadd.f32 %v508, %v598
  %v608 = vadd.f32 %v509, %v603
  %609 = vrot.lane.b32.xlu0 %v12, 104
  %v610 = vpop.permute.xlu0 %609
  %611 = vrot.lane.b32.xlu0 %v13, 104
  %v612 = vpop.permute.xlu0 %611
  %613 = vrot.lane.b32.xlu0 %v14, 104
  %v614 = vpop.permute.xlu0 %613
  %615 = vrot.lane.b32.xlu0 %v22, 116
  %v616 = vpop.permute.xlu0 %615
  %v617 = vsel %vm35, %v610, 0
  %v619 = vsel %vm35, %v612, 0
  %v621 = vsel %vm35, %v614, 0
  %v623 = vsel %vm42, %v616, 0
  %625 = vmatprep.subr.mxu0 0.0
  %626 = vmatpush1.msra.mxu0 %v623
  %627 = vmatprep.subr.mxu0 0.0
  %628 = vmatpush1.msra.mxu0 0.0
  %629 = vmatprep.subr.mxu0 0.0
  %630 = vmatpush1.msra.mxu0 0.0
  %631 = vmatprep.subr.mxu0 0.0
  %632 = vmatpush1.msra.mxu0 0.0
  %633 = vmatprep.subr.mxu0 0.0
  %634 = vmatpush1.msra.mxu0 0.0
  %635 = vmatprep.subr.mxu0 0.0
  %636 = vmatpush1.msra.mxu0 0.0
  %637 = vmatprep.subr.mxu0 0.0
  %638 = vmatpush1.msra.mxu0 0.0
  %639 = vmatprep.subr.mxu0 0.0
  %640 = vmatpush1.msra.mxu0 0.0
  %641 = vmatprep.subr.mxu0 0.0
  %642 = vmatpush1.msra.mxu0 0.0
  %643 = vmatprep.subr.mxu0 0.0
  %644 = vmatpush1.msra.mxu0 0.0
  %645 = vmatprep.subr.mxu0 0.0
  %646 = vmatpush1.msra.mxu0 0.0
  %647 = vmatprep.subr.mxu0 0.0
  %648 = vmatpush1.msra.mxu0 0.0
  %649 = vmatprep.subr.mxu0 0.0
  %650 = vmatpush1.msra.mxu0 0.0
  %651 = vmatprep.subr.mxu0 0.0
  %652 = vmatpush1.msra.mxu0 0.0
  %653 = vmatprep.subr.mxu0 0.0
  %654 = vmatpush1.msra.mxu0 0.0
  %655 = vmatprep.subr.mxu0 0.0
  %656 = vmatpush1.msra.mxu0 0.0
  %657 = vmatprep.subr.mxu0 0.0
  %658 = vmatpush1.msra.mxu0 0.0
  %659 = vmatprep.subr.mxu0 0.0
  %660 = vmatpush1.msra.mxu0 0.0
  %661 = vmatprep.subr.mxu0 0.0
  %662 = vmatpush1.msra.mxu0 0.0
  %663 = vmatprep.subr.mxu0 0.0
  %664 = vmatpush1.msra.mxu0 0.0
  %665 = vmatprep.subr.mxu0 0.0
  %666 = vmatpush1.msra.mxu0 0.0
  %667 = vmatprep.subr.mxu0 0.0
  %668 = vmatpush1.msra.mxu0 0.0
  %669 = vmatprep.subr.mxu0 0.0
  %670 = vmatpush1.msra.mxu0 0.0
  %671 = vmatprep.subr.mxu0 0.0
  %672 = vmatpush1.msra.mxu0 0.0
  %673 = vmatprep.subr.mxu0 0.0
  %674 = vmatpush1.msra.mxu0 0.0
  %675 = vmatprep.subr.mxu0 0.0
  %676 = vmatpush1.msra.mxu0 0.0
  %677 = vmatprep.subr.mxu0 0.0
  %678 = vmatpush1.msra.mxu0 0.0
  %679 = vmatprep.subr.mxu0 0.0
  %680 = vmatpush1.msra.mxu0 0.0
  %681 = vmatprep.subr.mxu0 0.0
  %682 = vmatpush1.msra.mxu0 0.0
  %683 = vmatprep.subr.mxu0 0.0
  %684 = vmatpush1.msra.mxu0 0.0
  %685 = vmatprep.subr.mxu0 0.0
  %686 = vmatpush1.msra.mxu0 0.0
  %687 = vmatprep.subr.mxu0 0.0
  %688 = vmatpush1.msra.mxu0 0.0
  %689 = vmatprep.mubr.f32.mxu0 0.0
  %690 = vmatmul.mubr.f32.gmra.mrb[0].mxu0 %v617
  %v691 = vpop.f32.mrb[0].mxu0
  %v692 = vadd.f32 0.0, %v691
  %v693 = vpop.f32.mrb[0].mxu0
  %694 = vmatprep.mubr.f32.mxu0 0.0
  %695 = vmatmul.mubr.f32.gmra.mrb[0].mxu0 %v619
  %v696 = vpop.f32.mrb[0].mxu0
  %v697 = vadd.f32 0.0, %v696
  %v698 = vpop.f32.mrb[0].mxu0
  %699 = vmatprep.mubr.f32.mxu0 0.0
  %700 = vmatmul.mubr.f32.gmra.mrb[0].mxu0 %v621
  %v701 = vpop.f32.mrb[0].mxu0
  %v702 = vadd.f32 0.0, %v701
  %v703 = vpop.f32.mrb[0].mxu0
  %704 = vdwg.mxu0
  %v705 = vadd.f32 %v606, %v692
  %v706 = vadd.f32 %v607, %v697
  %v707 = vadd.f32 %v608, %v702
  %vm708 = vcmask 261120
  %v709 = vsel %vm708, %v705, 0.0
  %710 = vadd.xlane.f32.xlu0 %v709
  %v711 = vpop.xlane.xlu0 %710
  %v712 = vsel %vm708, %v706, 0.0
  %713 = vadd.xlane.f32.xlu0 %v712
  %v714 = vpop.xlane.xlu0 %713
  %v715 = vsel %vm708, %v707, 0.0
  %716 = vadd.xlane.f32.xlu0 %v715
  %v717 = vpop.xlane.xlu0 %716
  %v718 = vmul.f32 %v711, 0.03125
  %v719 = vmul.f32 %v714, 0.03125
  %v720 = vmul.f32 %v717, 0.03125
  %v721 = vsub.f32 %v705, %v718
  %v722 = vsub.f32 %v706, %v719
  %v723 = vsub.f32 %v707, %v720
  %v724 = vmul.f32 %v721, %v721
  %v725 = vmul.f32 %v722, %v722
  %v726 = vmul.f32 %v723, %v723
  %v727 = vsel %vm708, %v724, 0.0
  %728 = vadd.xlane.f32.xlu0 %v727
  %v729 = vpop.xlane.xlu0 %728
  %v730 = vsel %vm708, %v725, 0.0
  %731 = vadd.xlane.f32.xlu0 %v730
  %v732 = vpop.xlane.xlu0 %731
  %v733 = vsel %vm708, %v726, 0.0
  %734 = vadd.xlane.f32.xlu0 %v733
  %v735 = vpop.xlane.xlu0 %734
  %v736 = vmul.f32 %v729, 0.03125
  %v737 = vmul.f32 %v732, 0.03125
  %v738 = vmul.f32 %v735, 0.03125
  %v739 = vadd.f32 %v736, 1e-05
  %v740 = vadd.f32 %v737, 1e-05
  %v741 = vadd.f32 %v738, 1e-05
  %v742 = vrsqrt.pop %v739
  %v743 = vrsqrt.pop %v740
  %v744 = vrsqrt.pop %v741
  %v745 = vmul.f32 %v721, %v742
  %v746 = vmul.f32 %v722, %v743
  %v747 = vmul.f32 %v723, %v744
  %v748 = vmax.f32 %v745, 0.0
  %v749 = vmax.f32 %v746, 0.0
  %v750 = vmax.f32 %v747, 0.0
  %751 = vst.msk [vmem:[%s2] sm:$0xff] %vm708, %v748
  %752 = vst.msk [vmem:[%s2 + $0x8] sm:$0xff] %vm708, %v749
  %753 = vst.msk [vmem:[%s2 + $0x10] sm:$0xff] %vm708, %v750
  // Predicated region
  $region10: #{_lambda_.1} parent=0 // pred_check
    _
  $region11: #{_lambda_.1} parent=0 // pred_check_branch
    %755 = sbr.rel (0) target = $region13
  $region12: #{_lambda_.1} parent=0 // pred_region
    _
  $region13: #{_lambda_.1} parent=0 // pred_fallthru
    _
  // Predicated region
  $region14: #{_lambda_.1} parent=0 // pred_check
    _
  $region15: #{_lambda_.1} parent=0 // pred_check_branch
    %757 = sbr.rel (0) target = $region17
  $region16: #{_lambda_.1} parent=0 // pred_region
    _
  $region17: #{_lambda_.1} parent=0 // pred_fallthru
    _

</llo_original>
